<compile_context>
chip_gen: v7x
topology: tpu7x:2x2x1
jax: 0.10.0
libtpu: 0.0.40
codegen_flags: <defaults>
</compile_context>

<pallas_src>
import jax
import jax.numpy as jnp
from jax.experimental import pallas as pl
from jax.experimental.pallas import tpu as pltpu

_LANES = 128


def _round_up(x, m):
    return ((x + m - 1) // m) * m


def _round_down(x, m):
    return (x // m) * m


def sequence_binary_cross_entropy(pred, label, lengths, normalize_length=False,
                                  target_tile_bytes=4 * 1024 * 1024,
                                  num_core_splits=1, core_parallel=False):
    """Pallas equivalent of SequenceBinaryCrossEntropy.forward.

    pred:   (B, T, D) logits (f32 or bf16)
    label:  (B, T, D) targets (f32 / bf16 / int8 / bool)
    lengths:(B,) valid time steps per batch row
    """
    B, T, D = pred.shape
    C = T * D
    assert C < 2 ** 31, "flat column index would overflow int32"
    num_core_splits = max(1, int(num_core_splits))

    # ---- lane-dense tiling plan ------------------------------------------------
    rows = pl.cdiv(C, _LANES)          # number of 128-lane rows per batch element
    C_pad = rows * _LANES              # pad at most to next multiple of 128

    p_isz = pred.dtype.itemsize
    l_isz = label.dtype.itemsize
    row_bytes = _LANES * max(p_isz, l_isz)

    # batch block so that b_blk * 8 * row_bytes <= target_tile_bytes (large-B guard)
    b_blk = int(min(B, max(1, target_tile_bytes // (8 * row_bytes))))
    # rows per block: multiple of 8, capped by what one core actually needs
    rpb = max(8, _round_down(target_tile_bytes // (b_blk * row_bytes), 8))
    rpb = min(rpb, _round_up(pl.cdiv(rows, num_core_splits), 8))
    if rpb > rows:
        rpb = rows                      # full-dim block (allowed by the (8,128) rule)

    num_bb = pl.cdiv(B, b_blk)          # batch blocks (last one may be partial)
    num_blocks = pl.cdiv(rows, rpb)     # column blocks (last one may be partial)
    num_j = pl.cdiv(num_blocks, num_core_splits)
    needs_guard = num_core_splits * num_j > num_blocks

    def to_tiles(a):
        a = a.reshape(B, C)
        if C_pad != C:                  # tiny pad (< 128 cols), often zero
            a = jnp.pad(a, ((0, 0), (0, C_pad - C)))
        return a.reshape(B, rows, _LANES)

    pred3 = to_tiles(pred)              # native dtype, cast to f32 in-kernel
    label3 = to_tiles(label)

    lens = jnp.minimum(lengths.astype(jnp.int32), T)   # matches make_pad_mask
    lens_cols = lens * D                                # valid flat columns / batch
    B_pad = num_bb * b_blk
    if B_pad != B:                      # zero lens for OOB batch rows -> fully masked
        lens_cols = jnp.pad(lens_cols, (0, B_pad - B))
    lens_cols = lens_cols.reshape(B_pad, 1, 1)

    # ---- VMEM budget ------------------------------------------------------------
    blk_elems = b_blk * rpb * _LANES
    vmem_need = (2 * blk_elems * (p_isz + l_isz)   # double-buffered input tiles
                 + rpb * _LANES * 4                # accumulator scratch
                 + 6 * blk_elems * 4               # elementwise f32 temporaries
                 + (1 << 20))
    vmem_limit = int(min(max(vmem_need, 32 << 20), 48 << 20))   # safe on v5e/v6e/v7x

    # ---- kernel ------------------------------------------------------------------
    def kernel(pred_ref, label_ref, lens_ref, out_ref, acc_ref):
        c = pl.program_id(0)      # core split (parallel)
        bb = pl.program_id(1)     # batch block (reduction)
        j = pl.program_id(2)      # column block (reduction)

        @pl.when((bb == 0) & (j == 0))
        def _init():
            acc_ref[...] = jnp.zeros_like(acc_ref)

        blk = c * num_j + j       # logical column-block index handled this step

        def _accumulate():
            x = pred_ref[...].astype(jnp.float32)     # logits
            y = label_ref[...].astype(jnp.float32)    # targets
            # BCEWithLogitsLoss(reduction='none'), numerically stable:
            #   loss = max(x, 0) - x*y + log1p(exp(-|x|))
            loss = jnp.maximum(x, 0.0) - x * y + jnp.log1p(jnp.exp(-jnp.abs(x)))

            # flat column index of each element within this tile
            base = (jax.lax.broadcasted_iota(jnp.int32, (rpb, _LANES), 0) * _LANES
                    + jax.lax.broadcasted_iota(jnp.int32, (rpb, _LANES), 1))
            thresh = lens_ref[...] - blk * (rpb * _LANES)      # (b_blk, 1, 1)
            valid = base[None, :, :] < thresh                  # (b_blk, rpb, 128)

            # select (NOT multiply): OOB tails may hold Inf/NaN garbage
            acc_ref[...] += jnp.sum(jnp.where(valid, loss, 0.0), axis=0)

        if needs_guard:
            pl.when(blk < num_blocks)(_accumulate)   # skip fully out-of-range blocks
        else:
            _accumulate()

        @pl.when((bb == pl.num_programs(1) - 1) & (j == pl.num_programs(2) - 1))
        def _finalize():
            total = jnp.sum(acc_ref[...])            # single cross-lane reduce / core
            out_ref[...] = jnp.broadcast_to(total, (8, _LANES))

    if needs_guard:
        def col_block(c, j):
            return jnp.minimum(c * num_j + j, num_blocks - 1)   # keep DMA in bounds
    else:
        def col_block(c, j):
            return c * num_j + j

    lead_sem = pltpu.CORE_PARALLEL if core_parallel else pltpu.PARALLEL

    out = pl.pallas_call(
        kernel,
        out_shape=jax.ShapeDtypeStruct((num_core_splits * 8, _LANES), jnp.float32),
        grid_spec=pltpu.PrefetchScalarGridSpec(
            num_scalar_prefetch=0,
            grid=(num_core_splits, num_bb, num_j),
            in_specs=[
                pl.BlockSpec((b_blk, rpb, _LANES),
                             lambda c, bb, j: (bb, col_block(c, j), 0)),
                pl.BlockSpec((b_blk, rpb, _LANES),
                             lambda c, bb, j: (bb, col_block(c, j), 0)),
                pl.BlockSpec((b_blk, 1, 1), lambda c, bb, j: (bb, 0, 0)),
            ],
            out_specs=pl.BlockSpec((8, _LANES), lambda c, bb, j: (c, 0)),
            scratch_shapes=[
                pltpu.VMEM((rpb, _LANES), jnp.float32),   # lane-dense partial sums
            ],
        ),
        compiler_params=pltpu.CompilerParams(
            dimension_semantics=(lead_sem, pltpu.ARBITRARY, pltpu.ARBITRARY),
            vmem_limit_bytes=vmem_limit),
    )(pred3, label3, lens_cols)

    loss_sum = jnp.sum(out[0::8, 0])                 # one scalar per core slab

    if normalize_length:
        denom = jnp.sum(lens).astype(jnp.float32)    # exact non-pad step count
    else:
        denom = jnp.float32(B)
    return loss_sum / denom


def _reference(pred, label, lengths, normalize_length=False):
    """Plain-JAX reference mirroring the PyTorch module."""
    B, T, D = pred.shape
    pred = pred.astype(jnp.float32)
    label = label.astype(jnp.float32)
    pad_mask = jnp.arange(T)[None, :] >= jnp.minimum(lengths, T)[:, None]   # (B, T)
    loss = (jnp.maximum(pred, 0.0) - pred * label
            + jnp.log1p(jnp.exp(-jnp.abs(pred))))
    loss = jnp.where(pad_mask[:, :, None], 0.0, loss)
    denom = (~pad_mask).sum() if normalize_length else B
    return loss.sum() / denom


if __name__ == "__main__":
    key = jax.random.PRNGKey(0)
    k1, k2, k3, k4 = jax.random.split(key, 4)

    # ---- main config -----------------------------------------------------------
    B, T, D = 2, 16, 32
    pred = jax.random.normal(k1, (B, T, D), dtype=jnp.float32)
    label = (jax.random.uniform(k2, (B, T, D)) > 0.5).astype(jnp.float32)
    lengths = jnp.array([16, 9], dtype=jnp.int32)

    ref = _reference(pred, label, lengths, normalize_length=False)
    out = jax.block_until_ready(
        sequence_binary_cross_entropy(pred, label, lengths, normalize_length=False))
    assert jnp.allclose(out, ref, rtol=1e-5, atol=1e-5), (out, ref)

    ref_n = _reference(pred, label, lengths, normalize_length=True)
    out_n = jax.block_until_ready(
        sequence_binary_cross_entropy(pred, label, lengths, normalize_length=True))
    assert jnp.allclose(out_n, ref_n, rtol=1e-5, atol=1e-5), (out_n, ref_n)

    # low-precision streaming path (bf16 logits + int8 labels -> ~half HBM bytes)
    out_lp = jax.block_until_ready(
        sequence_binary_cross_entropy(pred.astype(jnp.bfloat16),
                                      label.astype(jnp.int8), lengths,
                                      normalize_length=False))
    assert jnp.allclose(out_lp, ref, rtol=2e-2, atol=1e-2), (out_lp, ref)

    # optional 2-way core split (exercises the out-of-range column-block guard)
    out_2 = jax.block_until_ready(
        sequence_binary_cross_entropy(pred, label, lengths, normalize_length=False,
                                      num_core_splits=2))
    assert jnp.allclose(out_2, ref, rtol=1e-5, atol=1e-5), (out_2, ref)

    # ---- stress config: partial batch block, partial column block, 128-col pad --
    B2, T2, D2 = 3, 47, 24
    pred_s = jax.random.normal(k3, (B2, T2, D2), dtype=jnp.float32)
    label_s = (jax.random.uniform(k4, (B2, T2, D2)) > 0.5).astype(jnp.float32)
    lengths_s = jnp.array([47, 20, 37], dtype=jnp.int32)

    ref_s = _reference(pred_s, label_s, lengths_s, normalize_length=True)
    out_s = jax.block_until_ready(
        sequence_binary_cross_entropy(pred_s, label_s, lengths_s,
                                      normalize_length=True,
                                      target_tile_bytes=8192))   # force small tiles
    assert jnp.allclose(out_s, ref_s, rtol=1e-5, atol=1e-5), (out_s, ref_s)

    print("KERNEL_OK")
</pallas_src>

<mosaic_0001>
module attributes {stable_mosaic.version = 11 : i64} {
  func.func @kernel(%arg0: i32, %arg1: i32, %arg2: i32, %arg3: memref<2x4x128xf32, #tpu.memory_space<vmem>>, %arg4: memref<2x4x128xf32, #tpu.memory_space<vmem>>, %arg5: memref<2x1x1xi32, #tpu.memory_space<vmem>>, %arg6: memref<8x128xf32, #tpu.memory_space<vmem>>, %arg7: memref<4x128xf32, #tpu.memory_space<vmem>>) attributes {dimension_semantics = [#tpu.dimension_semantics<parallel>, #tpu.dimension_semantics<arbitrary>, #tpu.dimension_semantics<arbitrary>], iteration_bounds = array<i64: 1, 1, 1>, scalar_prefetch = 0 : i64, scratch_operands = 1 : i64, tpu.core_type = #tpu.core_type<tc>, window_params = [{transform_indices = @transform_0, window_bounds = array<i64: 2, 4, 128>}, {transform_indices = @transform_1, window_bounds = array<i64: 2, 4, 128>}, {transform_indices = @transform_2, window_bounds = array<i64: 2, 1, 1>}, {transform_indices = @transform_3, window_bounds = array<i64: 8, 128>}]} {
    %c0_i32 = arith.constant 0 : i32
    %0 = arith.cmpi eq, %arg1, %c0_i32 : i32
    %c0_i32_0 = arith.constant 0 : i32
    %1 = arith.cmpi eq, %arg2, %c0_i32_0 : i32
    %2 = arith.andi %0, %1 : i1
    %3 = arith.extui %2 : i1 to i32
    %c0_i32_1 = arith.constant 0 : i32
    %4 = arith.cmpi ne, %3, %c0_i32_1 : i32
    scf.if %4 {
      %cst_20 = arith.constant 0.000000e+00 : f32
      %43 = vector.broadcast %cst_20 : f32 to vector<4x128xf32>
      %c0_21 = arith.constant 0 : index
      %c0_22 = arith.constant 0 : index
      %44 = vector.load %arg7[%c0_21, %c0_22] : memref<4x128xf32, #tpu.memory_space<vmem>>, vector<4x128xf32>
      tpu.vector_store %arg7[%c0_21, %c0_22], %43 {strides = array<i32>} : memref<4x128xf32, #tpu.memory_space<vmem>>, vector<4x128xf32>,
    } else {
    }
    %c1_i32 = arith.constant 1 : i32
    %5 = arith.muli %arg0, %c1_i32 : i32
    %6 = arith.addi %5, %arg2 : i32
    %c0 = arith.constant 0 : index
    %c0_2 = arith.constant 0 : index
    %c0_3 = arith.constant 0 : index
    %7 = vector.load %arg3[%c0, %c0_2, %c0_3] : memref<2x4x128xf32, #tpu.memory_space<vmem>>, vector<2x4x128xf32>
    %c0_4 = arith.constant 0 : index
    %c0_5 = arith.constant 0 : index
    %c0_6 = arith.constant 0 : index
    %8 = vector.load %arg4[%c0_4, %c0_5, %c0_6] : memref<2x4x128xf32, #tpu.memory_space<vmem>>, vector<2x4x128xf32>
    %cst = arith.constant 0.000000e+00 : f32
    %9 = vector.broadcast %cst : f32 to vector<2x4x128xf32>
    %10 = arith.maximumf %7, %9 : vector<2x4x128xf32>
    %11 = arith.mulf %7, %8 : vector<2x4x128xf32>
    %12 = arith.subf %10, %11 : vector<2x4x128xf32>
    %13 = math.absf %7 : vector<2x4x128xf32>
    %cst_7 = arith.constant 0.000000e+00 : f32
    %14 = vector.broadcast %cst_7 : f32 to vector<2x4x128xf32>
    %15 = arith.subf %14, %13 : vector<2x4x128xf32>
    %16 = math.exp %15 : vector<2x4x128xf32>
    %17 = math.log1p %16 : vector<2x4x128xf32>
    %18 = arith.addf %12, %17 : vector<2x4x128xf32>
    %19 = tpu.iota {dimensions = array<i32: 0>} : vector<4x128xi32>
    %c128_i32 = arith.constant 128 : i32
    %20 = vector.broadcast %c128_i32 : i32 to vector<4x128xi32>
    %21 = arith.muli %19, %20 : vector<4x128xi32>
    %22 = tpu.iota {dimensions = array<i32: 1>} : vector<4x128xi32>
    %23 = arith.addi %21, %22 : vector<4x128xi32>
    %c0_8 = arith.constant 0 : index
    %c0_9 = arith.constant 0 : index
    %c0_10 = arith.constant 0 : index
    %24 = vector.load %arg5[%c0_8, %c0_9, %c0_10] : memref<2x1x1xi32, #tpu.memory_space<vmem>>, vector<2x1x1xi32>
    %c512_i32 = arith.constant 512 : i32
    %25 = arith.muli %6, %c512_i32 : i32
    %26 = vector.broadcast %25 : i32 to vector<2x1x1xi32>
    %27 = arith.subi %24, %26 : vector<2x1x1xi32>
    %28 = vector.shape_cast %23 : vector<4x128xi32> to vector<1x4x128xi32>
    %29 = vector.broadcast %28 : vector<1x4x128xi32> to vector<2x4x128xi32>
    %30 = vector.broadcast %27 : vector<2x1x1xi32> to vector<2x4x128xi32>
    %31 = arith.cmpi slt, %29, %30 : vector<2x4x128xi32>
    %c0_11 = arith.constant 0 : index
    %c0_12 = arith.constant 0 : index
    %32 = vector.load %arg7[%c0_11, %c0_12] : memref<4x128xf32, #tpu.memory_space<vmem>>, vector<4x128xf32>
    %cst_13 = arith.constant 0.000000e+00 : f32
    %33 = vector.broadcast %cst_13 : f32 to vector<2x4x128xf32>
    %34 = arith.select %31, %18, %33 : vector<2x4x128xi1>, vector<2x4x128xf32>
    %cst_14 = arith.constant dense<0.000000e+00> : vector<4x128xf32>
    %35 = vector.multi_reduction <add>, %34, %cst_14 [0] : vector<2x4x128xf32> to vector<4x128xf32>
    %36 = arith.addf %32, %35 : vector<4x128xf32>
    %c0_15 = arith.constant 0 : index
    %c0_16 = arith.constant 0 : index
    %37 = vector.load %arg7[%c0_15, %c0_16] : memref<4x128xf32, #tpu.memory_space<vmem>>, vector<4x128xf32>
    tpu.vector_store %arg7[%c0_15, %c0_16], %36 {strides = array<i32>} : memref<4x128xf32, #tpu.memory_space<vmem>>, vector<4x128xf32>,
    %c0_i32_17 = arith.constant 0 : i32
    %38 = arith.cmpi eq, %arg1, %c0_i32_17 : i32
    %c0_i32_18 = arith.constant 0 : i32
    %39 = arith.cmpi eq, %arg2, %c0_i32_18 : i32
    %40 = arith.andi %38, %39 : i1
    %41 = arith.extui %40 : i1 to i32
    %c0_i32_19 = arith.constant 0 : i32
    %42 = arith.cmpi ne, %41, %c0_i32_19 : i32
    scf.if %42 {
      %c0_20 = arith.constant 0 : index
      %c0_21 = arith.constant 0 : index
      %43 = vector.load %arg7[%c0_20, %c0_21] : memref<4x128xf32, #tpu.memory_space<vmem>>, vector<4x128xf32>
      %44 = vector.shape_cast %43 : vector<4x128xf32> to vector<1x4x128xf32>
      %cst_22 = arith.constant dense<0.000000e+00> : vector<1xf32>
      %45 = vector.multi_reduction <add>, %44, %cst_22 [1, 2] : vector<1x4x128xf32> to vector<1xf32>
      %46 = vector.shape_cast %45 : vector<1xf32> to vector<1x1x1xf32>
      %47 = vector.extract %46[0, 0, 0] : f32 from vector<1x1x1xf32>
      %48 = vector.broadcast %47 : f32 to vector<8x128xf32>
      %c0_23 = arith.constant 0 : index
      %c0_24 = arith.constant 0 : index
      %49 = vector.load %arg6[%c0_23, %c0_24] : memref<8x128xf32, #tpu.memory_space<vmem>>, vector<8x128xf32>
      tpu.vector_store %arg6[%c0_23, %c0_24], %48 {strides = array<i32>} : memref<8x128xf32, #tpu.memory_space<vmem>>, vector<8x128xf32>,
    } else {
    }
    return
  }
  func.func @transform_0(%arg0: i32, %arg1: i32, %arg2: i32) -> (i32, i32, i32) {
    %c1_i32 = arith.constant 1 : i32
    %0 = arith.muli %arg0, %c1_i32 : i32
    %1 = arith.addi %0, %arg2 : i32
    %c0_i32 = arith.constant 0 : i32
    %c0_i32_0 = arith.constant 0 : i32
    return %arg1, %1, %c0_i32 : i32, i32, i32
  }
  func.func @transform_1(%arg0: i32, %arg1: i32, %arg2: i32) -> (i32, i32, i32) {
    %c1_i32 = arith.constant 1 : i32
    %0 = arith.muli %arg0, %c1_i32 : i32
    %1 = arith.addi %0, %arg2 : i32
    %c0_i32 = arith.constant 0 : i32
    %c0_i32_0 = arith.constant 0 : i32
    return %arg1, %1, %c0_i32 : i32, i32, i32
  }
  func.func @transform_2(%arg0: i32, %arg1: i32, %arg2: i32) -> (i32, i32, i32) {
    %c0_i32 = arith.constant 0 : i32
    %c0_i32_0 = arith.constant 0 : i32
    %c0_i32_1 = arith.constant 0 : i32
    return %arg1, %c0_i32, %c0_i32_0 : i32, i32, i32
  }
  func.func @transform_3(%arg0: i32, %arg1: i32, %arg2: i32) -> (i32, i32) {
    %c0_i32 = arith.constant 0 : i32
    %c0_i32_0 = arith.constant 0 : i32
    return %arg0, %c0_i32 : i32, i32
  }
}

</mosaic_0001>

<llo_original>
// kernel: tpu_custom_call.1
$region0: #{tpu_custom_call.1}
  #allocation0 [shape = 'u32[]', space=smem, size = 0x4, offset = 0x4, fixed_abs, tag = 'smem constant byte address 0x4 - core index']
  #allocation1 [shape = 'u32[144,128]{1,0:T(1,128)}', space=vmem, size = 0x12000, scoped, tag = 'internal scratch']
  #allocation2 [shape = 'f32[4,128]{1,0:T(4,128)}', space=vmem, size = 0x800, scoped, tag = 'scratch operand']
  %s0 = inlined_call_operand.hbm [shape: f32[2,4,128], index: 0, kind: input, shape index: {}]
  %s1 = inlined_call_operand.hbm [shape: f32[2,4,128], index: 1, kind: input, shape index: {}]
  %s2 = inlined_call_operand.vmem [shape: s32[2,1,1], index: 2, kind: input, shape index: {}]
  %s3 = inlined_call_operand.hbm [shape: f32[8,128], index: 3, kind: output, shape index: {}]
  %s4 = sld [smem:[#allocation0]]
  $region38: #{tpu_custom_call.1} parent=0
    _
  %s6 = ssub.s32 1, %s4
  %s7 = scalar_select 0, %s6, %s4
  $region1: #{tpu_custom_call.1} parent=0
    #allocation3 [shape = 'u8[4096]{0}', space=vmem, size = 0x1000, scoped, tag = 'input window, operand 0, single buffered']
    #allocation4 [shape = 's32[1]{0}', space=sflag, size = 0x4, scoped, tag = 'scoped memory for tpu_custom_call.1']
    #allocation5 [shape = 's32[1]{0}', space=sflag, size = 0x4, scoped, tag = 'scoped memory for tpu_custom_call.1']
    #allocation6 [shape = 'u8[4096]{0}', space=vmem, size = 0x1000, scoped, tag = 'input window, operand 1, single buffered']
    #allocation7 [shape = 's32[1]{0}', space=sflag, size = 0x4, scoped, tag = 'scoped memory for tpu_custom_call.1']
    #allocation8 [shape = 'u8[4096]{0}', space=vmem, size = 0x1000, scoped, tag = 'output window, operand 0, single buffered']
    %8 = vsyncpa [#allocation4], 0
    %9 = vsyncpa [#allocation7], 0
    %10 = vsyncpa [#allocation5], 0
    // Predicated region
    $region2: #{tpu_custom_call.1} parent=1 // pred_check
      _
    $region3: #{tpu_custom_call.1} parent=1 // pred_check_branch
      %12 = sbr.rel (0) target = $region5
    $region4: #{tpu_custom_call.1} parent=1 // pred_region
      %s13 = sadd.s32 0, 0
      %s15 = ssub.s32 128, 128
      %16 = vsyncadd [#allocation4], %s15
      %s17 = smul.addr %s13, 64
      %s18 = scalar_lea.hbm %s0, %s17
      %s19 = sshll.u32 [#allocation3], 4
      %s20 = int_to_ptr.vmem [resolvable:$true] %s19
      %25 = dma.hbm_to_vmem [thread:$0]  %s18, 128, %s20, [#allocation4], 64, 64, 4
    $region5: #{tpu_custom_call.1} parent=1 // pred_fallthru
      _
    // Predicated region
    $region6: #{tpu_custom_call.1} parent=1 // pred_check
      _
    $region7: #{tpu_custom_call.1} parent=1 // pred_check_branch
      %27 = sbr.rel (0) target = $region9
    $region8: #{tpu_custom_call.1} parent=1 // pred_region
      %s28 = sadd.s32 0, 0
      %s30 = ssub.s32 128, 128
      %31 = vsyncadd [#allocation7], %s30
      %s32 = smul.addr %s28, 64
      %s33 = scalar_lea.hbm %s1, %s32
      %s34 = sshll.u32 [#allocation6], 4
      %s35 = int_to_ptr.vmem [resolvable:$true] %s34
      %40 = dma.hbm_to_vmem [thread:$0]  %s33, 128, %s35, [#allocation7], 64, 64, 4
    $region9: #{tpu_custom_call.1} parent=1 // pred_fallthru
      _
    // Predicated region
    $region10: #{tpu_custom_call.1} parent=1 // pred_check
      _
    $region11: #{tpu_custom_call.1} parent=1 // pred_check_branch
      %42 = sbr.rel (0) target = $region13
    $region12: #{tpu_custom_call.1} parent=1 // pred_region
      _
    $region13: #{tpu_custom_call.1} parent=1 // pred_fallthru
      _
    // Predicated region
    $region14: #{tpu_custom_call.1} parent=1 // pred_check
      _
    $region15: #{tpu_custom_call.1} parent=1 // pred_check_branch
      %44 = sbr.rel (0) target = $region17
    $region16: #{tpu_custom_call.1} parent=1 // pred_region
      %45 = dma.done [#allocation4], 128
    $region17: #{tpu_custom_call.1} parent=1 // pred_fallthru
      _
    // Predicated region
    $region18: #{tpu_custom_call.1} parent=1 // pred_check
      _
    $region19: #{tpu_custom_call.1} parent=1 // pred_check_branch
      %47 = sbr.rel (0) target = $region21
    $region20: #{tpu_custom_call.1} parent=1 // pred_region
      %48 = dma.done [#allocation7], 128
    $region21: #{tpu_custom_call.1} parent=1 // pred_fallthru
      _
    %s49 = sadd.s32 0, 0
    %s50 = sadd.s32 0, 0
    %p51 = scmp.eq.s32.totalorder 0, 0
    %p52 = scmp.eq.s32.totalorder 0, 0
    %p53 = pnand %p51, %p52
    %p54 = pneg %p53
    // Predicated region
    $region22: #{tpu_custom_call.1} parent=1 // pred_check
      _
    $region23: #{tpu_custom_call.1} parent=1 // pred_check_branch
      %56 = sbr.rel (%p53) target = $region25
    $region24: #{tpu_custom_call.1} parent=1 // pred_region
      %57 = vst [vmem:[#allocation2] sm:$0xf] 0.0
    $region25: #{tpu_custom_call.1} parent=1 // pred_fallthru
      _
    %s58 = sadd.s32 0, 0
    %v59 = vld [vmem:[#allocation3] sm:$0xf]
    %v60 = vld [vmem:[#allocation3 + $0x4] sm:$0xf]
    %v61 = vld [vmem:[#allocation6] sm:$0xf]
    %v62 = vld [vmem:[#allocation6 + $0x4] sm:$0xf]
    %v63 = vmax.f32 %v59, 0.0
    %v64 = vmax.f32 %v60, 0.0
    %v65 = vmul.f32 %v59, %v61
    %v66 = vmul.f32 %v60, %v62
    %v67 = vsub.f32 %v63, %v65
    %v68 = vsub.f32 %v64, %v66
    %v69 = vand.u32 2147483647, %v59
    %v70 = vand.u32 2147483647, %v60
    %v71 = vsub.f32 0.0, %v69
    %v72 = vsub.f32 0.0, %v70
    %v73 = vmul.f32 %v71, 1.442695
    %v74 = vpow.pop %v73
    %v75 = vmul.f32 %v72, 1.442695
    %v76 = vpow.pop %v75
    %v77 = vadd.f32 %v74, 1.0
    %v78 = vlog2.pop %v77
    %v79 = vmul.f32 %v78, 0.6931472
    %v80 = vmul.f32 -0.5, %v74
    %v81 = vadd.f32 %v80, 1.0
    %v82 = vmul.f32 %v81, %v74
    %v83 = vand.u32 2147483647, %v74
    %vm84 = vcmp.lt.f32.partialorder %v83, 0.0004427343
    %v85 = vsel %vm84, %v82, %v79
    %v86 = vadd.f32 %v76, 1.0
    %v87 = vlog2.pop %v86
    %v88 = vmul.f32 %v87, 0.6931472
    %v89 = vmul.f32 -0.5, %v76
    %v90 = vadd.f32 %v89, 1.0
    %v91 = vmul.f32 %v90, %v76
    %v92 = vand.u32 2147483647, %v76
    %vm93 = vcmp.lt.f32.partialorder %v92, 0.0004427343
    %v94 = vsel %vm93, %v91, %v88
    %v95 = vadd.f32 %v67, %v85
    %v96 = vadd.f32 %v68, %v94
    %v97 = vlaneseq
    %v98 = vshrl.u32 %v97, 7
    %v99 = vmul.u32 %v98, 128
    %v100 = vlaneseq
    %v101 = vand.u32 %v100, 127
    %v102 = vadd.s32 %v99, %v101
    %v103 = vld [vmem:[%s2] sm:$0x1]
    %v104 = vld [vmem:[%s2 + $0x1] sm:$0x1]
    %s105 = smul.u32 %s58, 512
    %v106 = vstv %s105
    %v107 = vsub.s32 %v103, %v106
    %v108 = vsub.s32 %v104, %v106
    %v109 = vlaneseq
    %v110 = vshrl.u32 %v109, 7
    %v111 = vsub.s32 0, %v110
    %v112 = vrot.slane %v107, %v111
    %v113 = vlaneseq
    %v114 = vshrl.u32 %v113, 7
    %v115 = vsub.s32 0, %v114
    %v116 = vrot.slane %v108, %v115
    %117 = vset.pattern.permute.xlu0 0
    %118 = vperm.xlu0 %117, %v112
    %v119 = vpop.permute.xlu0 %118
    %120 = vset.pattern.permute.xlu0 0
    %121 = vperm.xlu0 %120, %v116
    %v122 = vpop.permute.xlu0 %121
    %vm123 = vcmp.lt.s32.totalorder %v102, %v119
    %vm124 = vcmp.lt.s32.totalorder %v102, %v122
    %v125 = vld [vmem:[#allocation2] sm:$0xf]
    %v126 = vsel %vm123, %v95, 0.0
    %v127 = vsel %vm124, %v96, 0.0
    %vm128 = vcmask 1043456
    %v129 = vsel %vm128, %v126, 0.0
    %v130 = vsel %vm128, %v127, 0.0
    %v131 = vadd.f32 %v129, %v130
    %v132 = vadd.f32 %v125, %v131
    %133 = vst [vmem:[#allocation2] sm:$0xf] %v132
    // Predicated region
    $region26: #{tpu_custom_call.1} parent=1 // pred_check
      _
    $region27: #{tpu_custom_call.1} parent=1 // pred_check_branch
      %135 = sbr.rel (%p53) target = $region29
    $region28: #{tpu_custom_call.1} parent=1 // pred_region
      %v136 = vld [vmem:[#allocation2] sm:$0xf]
      %v137 = vsel %vm128, %v136, 0.0
      %138 = vadd.xlane.f32.xlu0 %v137
      %v139 = vpop.xlane.xlu0 %138
      %v140 = vrot.slane %v139, 4
      %v141 = vadd.f32 %v139, %v140
      %v142 = vrot.slane %v141, 2
      %v143 = vadd.f32 %v141, %v142
      %v144 = vrot.slane %v143, 1
      %v145 = vadd.f32 %v143, %v144
      %s146 = vtos %v145
      %v147 = vstv %s146
      %148 = vst [vmem:[#allocation8] sm:$0xff] %v147
    $region29: #{tpu_custom_call.1} parent=1 // pred_fallthru
      _
    // Predicated region
    $region30: #{tpu_custom_call.1} parent=1 // pred_check
      _
    $region31: #{tpu_custom_call.1} parent=1 // pred_check_branch
      %150 = sbr.rel (0) target = $region33
    $region32: #{tpu_custom_call.1} parent=1 // pred_region
      %s152 = ssub.s32 128, 128
      %153 = vsyncadd [#allocation5], %s152
      %s155 = sshll.u32 [#allocation8], 4
      %s156 = int_to_ptr.vmem [resolvable:$true] %s155
      %158 = dma.vmem_to_hbm [thread:$0]  %s156, 128, %s3, [#allocation5]
    $region33: #{tpu_custom_call.1} parent=1 // pred_fallthru
      _
    // Predicated region
    $region34: #{tpu_custom_call.1} parent=1 // pred_check
      _
    $region35: #{tpu_custom_call.1} parent=1 // pred_check_branch
      %160 = sbr.rel (0) target = $region37
    $region36: #{tpu_custom_call.1} parent=1 // pred_region
      %161 = dma.done [#allocation5], 128
    $region37: #{tpu_custom_call.1} parent=1 // pred_fallthru
      _
    %162 = vsyncpa [#allocation4], 1
    %163 = vsyncpa [#allocation7], 1
    %164 = vsyncpa [#allocation5], 1

</llo_original>
